<compile_context>
chip_gen: v7x
topology: tpu7x:2x2x1
jax: 0.10.0
libtpu: 0.0.40
codegen_flags: <defaults>
</compile_context>

<pallas_src>
import functools

import jax
import jax.numpy as jnp
from jax.experimental import pallas as pl
from jax.experimental.pallas import tpu as pltpu


_NEG_FILL = -1e9  # softplus(_NEG_FILL) == 0 exactly in float32 -> padding contributes 0


def _cdiv(a, b):
    return -(-a // b)


def _chunk_sums(x, tgt, p, start, limit):
    """Lane-partial sums over one (chunk, 128) slice.

    x:     (c, 128) float32 logits.
    tgt:   (c, P) int32 gt lane indices (sentinel -1)   if p > 0,
           (c, 128) int32 one-hot                       if p == 0.
    start: static row offset of this chunk inside the tile (used only when limit set).
    limit: None (all rows valid) or static int; tile-local rows >= limit are garbage
           from a ragged last block and must not contribute.
    Returns three (1, 128) float32 vectors: sum log(1-p), sum_gt x, sum_gt log(1-p).
    """
    # log(1 - sigmoid(x)) = -softplus(x) = -(max(x, 0) + log1p(exp(-|x|)))
    log1mp = -(jnp.maximum(x, 0.0) + jnp.log1p(jnp.exp(-jnp.abs(x))))

    if p == 0:
        is_gt = tgt != 0
    else:
        col = jax.lax.broadcasted_iota(jnp.int32, x.shape, 1)
        is_gt = col == tgt[:, 0:1]
        for j in range(1, p):          # short static compare chain (p <= 8)
            is_gt = jnp.logical_or(is_gt, col == tgt[:, j:j + 1])

    if limit is not None:
        row = start + jax.lax.broadcasted_iota(jnp.int32, (x.shape[0], 1), 0)
        valid = row < limit
        log1mp = jnp.where(valid, log1mp, 0.0)     # select: safe even for NaN garbage
        is_gt = jnp.logical_and(is_gt, valid)

    s_all = jnp.sum(log1mp, axis=0, keepdims=True)
    s_gt_x = jnp.sum(jnp.where(is_gt, x, 0.0), axis=0, keepdims=True)
    s_gt_l = jnp.sum(jnp.where(is_gt, log1mp, 0.0), axis=0, keepdims=True)
    return s_all, s_gt_x, s_gt_l


def _partial_sums_kernel(logits_ref, targets_ref, out_ref, *,
                         chunk, n_chunks, p, ragged, n_chunks_last, rem):
    """Per-tile partial sums, chunked so f32 temporaries stay small."""

    def load(c):
        if isinstance(c, int):
            start = c * chunk
        else:
            start = pl.multiple_of(c * chunk, chunk)
        x = logits_ref[pl.ds(start, chunk), :].astype(jnp.float32)
        t = targets_ref[pl.ds(start, chunk), :].astype(jnp.int32)
        return x, t

    def zeros():
        return (jnp.zeros((1, 128), jnp.float32),) * 3

    def add(acc, parts):
        return tuple(a + b for a, b in zip(acc, parts))

    def full_body(c, acc):
        x, t = load(c)
        return add(acc, _chunk_sums(x, t, p, 0, None))

    def write(acc):
        out_ref[...] = jnp.concatenate(acc, axis=0)[None]

    def full_tile():
        if n_chunks == 1:
            x, t = load(0)
            return _chunk_sums(x, t, p, 0, None)
        return jax.lax.fori_loop(0, n_chunks, full_body, zeros())

    if not ragged:
        write(full_tile())
    else:
        def last_tile():
            nfull = n_chunks_last - 1
            acc = zeros()
            if nfull > 0:
                acc = jax.lax.fori_loop(0, nfull, full_body, acc)
            x, t = load(nfull)                       # static chunk index
            return add(acc, _chunk_sums(x, t, p, nfull * chunk, rem))

        last = pl.num_programs(0) - 1

        @pl.when(pl.program_id(0) != last)
        def _():
            write(full_tile())

        @pl.when(pl.program_id(0) == last)
        def _():
            write(last_tile())


def encdec_prob_loss_sigmoid(logits_pred: jax.Array, tokens_gt: jax.Array, *,
                             target_block_bytes: int = 4 << 20,
                             chunk_rows: int = 512) -> jax.Array:
    """Pallas implementation of EncdecProbLossSigmoid.forward.

    Assumes 0 <= tokens_gt < n_tokens (PyTorch gather would raise on OOB) and
    B * S * n_tokens < 2**31.
    """
    B, S, N = logits_pred.shape
    assert N >= 2, "loss_nongt needs at least 2 tokens"
    R = B * S
    dtype = logits_pred.dtype
    if dtype not in (jnp.float32, jnp.bfloat16):
        # TODO(synk): float64 / integer inputs are evaluated in float32.
        logits_pred = logits_pred.astype(jnp.float32)
        dtype = jnp.float32
    itemsize = jnp.dtype(dtype).itemsize

    tok = tokens_gt.astype(jnp.int32).reshape(R)

    # ---- lane-dense (W, 128) view of the logits ---------------------------------
    total = R * N
    W = _cdiv(total, 128)
    flat = logits_pred.reshape(total)
    pad = W * 128 - total
    if pad:
        # Only hit when B*S*N % 128 != 0 (one extra HBM copy); padding contributes 0.
        flat = jnp.pad(flat, (0, pad), constant_values=_NEG_FILL)
    logits2d = flat.reshape(W, 128)

    # ---- ground-truth positions -> per-wide-row lane lists / dense one-hot ------
    g = jnp.arange(R, dtype=jnp.int32) * N + tok       # flat gt index, strictly increasing
    wide = g // 128
    lane = g % 128
    if N % 128 == 0:
        pmax = 1                     # 128-lane rows never straddle original rows
    elif 128 % N == 0:
        pmax = 128 // N              # original rows never straddle 128-lane rows
    else:
        pmax = 128 // N + 2          # >= 1 + ceil(127/N): safe upper bound

    if pmax <= 8:
        # int8 lane list per wide row (values 0..127); sentinel -1 never matches.
        first = jnp.searchsorted(g, wide * 128, side="left").astype(jnp.int32)
        rank = jnp.arange(R, dtype=jnp.int32) - first
        targets = jnp.full((W, pmax), -1, jnp.int8).at[wide, rank].set(
            lane.astype(jnp.int8))
        p = pmax
    else:
        # Tiny N: dense int8 one-hot caps the per-element compare chain (extra HBM
        # bytes; fine on v6e/v7x, small cost on the already HBM-bound v5e).
        targets = jnp.zeros((W, 128), jnp.int8).at[wide, lane].set(1)
        p = 0

    # ---- tiling ------------------------------------------------------------------
    chunk_rows = max(32, (int(chunk_rows) // 32) * 32)   # f32/bf16/int8 sublane-safe
    if W <= chunk_rows:
        tile = chunk = W
        num_tiles = n_chunks = 1
    else:
        chunk = chunk_rows
        rows_per_block = max(
            chunk, (int(target_block_bytes) // (128 * itemsize)) // chunk * chunk)
        tile = min(rows_per_block, _cdiv(W, chunk) * chunk)
        if tile >= W:                                    # always >= 2 tiles (v7x megacore)
            tile = _cdiv(_cdiv(W, 2), chunk) * chunk
        num_tiles = _cdiv(W, tile)
        if num_tiles > 2 and num_tiles % 2 == 1:         # prefer an even tile count
            cand = _cdiv(_cdiv(W, num_tiles + 1), chunk) * chunk
            if cand >= chunk and _cdiv(W, cand) % 2 == 0:
                tile, num_tiles = cand, _cdiv(W, cand)
        n_chunks = tile // chunk

    rem = W - (num_tiles - 1) * tile                     # valid rows in the last tile
    ragged = (num_tiles > 1) and (rem != tile)
    n_chunks_last = _cdiv(rem, chunk)

    kernel = functools.partial(
        _partial_sums_kernel, chunk=chunk, n_chunks=n_chunks, p=p,
        ragged=ragged, n_chunks_last=n_chunks_last, rem=rem)

    tdim = targets.shape[1]
    parts = pl.pallas_call(
        kernel,
        grid=(num_tiles,),
        in_specs=[
            pl.BlockSpec((tile, 128), lambda i: (i, 0)),
            pl.BlockSpec((tile, tdim), lambda i: (i, 0)),
        ],
        out_specs=pl.BlockSpec((1, 3, 128), lambda i: (i, 0, 0)),
        out_shape=jax.ShapeDtypeStruct((num_tiles, 3, 128), jnp.float32),
        compiler_params=pltpu.CompilerParams(
            dimension_semantics=("parallel",),
            vmem_limit_bytes=32 << 20),
        cost_estimate=pl.CostEstimate(
            flops=12 * W * 128,
            transcendentals=2 * W * 128,
            bytes_accessed=W * 128 * itemsize + W * tdim + num_tiles * 3 * 128 * 4),
    )(logits2d, targets)

    sum_all_log1mp = jnp.sum(parts[:, 0, :])
    sum_gt_x = jnp.sum(parts[:, 1, :])
    sum_gt_log1mp = jnp.sum(parts[:, 2, :])

    loss_gt = -(sum_gt_x + sum_gt_log1mp) / jnp.float32(R)
    loss_nongt = -(sum_all_log1mp - sum_gt_log1mp) / jnp.float32(R * (N - 1))
    return loss_gt + loss_nongt


def _reference_loss(logits_pred, tokens_gt):
    """Pure-JAX reference mirroring the PyTorch code path."""
    probs = jax.nn.sigmoid(logits_pred.astype(jnp.float32))
    B, S, N = probs.shape
    gt = tokens_gt.astype(jnp.int32)
    probs_gt = jnp.take_along_axis(probs, gt[..., None], axis=2)       # (B, S, 1)
    loss_gt = -jnp.mean(jnp.log(probs_gt))
    onehot = jax.nn.one_hot(gt, N, dtype=jnp.bool_)                    # (B, S, N)
    log_1mp = jnp.log(1.0 - probs)
    per_b = -jnp.sum(jnp.where(onehot, 0.0, log_1mp), axis=(1, 2)) / (S * (N - 1))
    loss_nongt = jnp.mean(per_b)
    return loss_gt + loss_nongt


if __name__ == "__main__":
    root = jax.random.PRNGKey(0)

    cases = [
        # (batch, seq_len, n_tokens, dtype, kwargs)
        (2, 8, 32, jnp.float32, {}),                       # 128 % N == 0, single tiny tile
        (2, 8, 48, jnp.float32, {}),                       # awkward N, repacked lane-dense
        (1, 7, 32, jnp.float32, {}),                       # B*S*N % 128 != 0 -> padded tail
        (2, 8, 8, jnp.float32, {}),                        # tiny N -> dense one-hot gt mask
        (2, 8, 32, jnp.bfloat16, {}),                      # bf16 streamed, f32 math in-kernel
        (2, 18, 128, jnp.float32, dict(chunk_rows=32)),    # 2 tiles, ragged last tile
        (2, 50, 128, jnp.float32, dict(chunk_rows=32)),    # multi-chunk fori_loop + ragged
    ]
    for idx, (B, S, N, dt, kw) in enumerate(cases):
        k1, k2 = jax.random.split(jax.random.fold_in(root, idx))
        logits_pred = jax.random.normal(k1, (B, S, N), dtype=jnp.float32).astype(dt)
        tokens_gt = jax.random.randint(k2, (B, S), 0, N, dtype=jnp.int32)

        loss = jax.block_until_ready(
            encdec_prob_loss_sigmoid(logits_pred, tokens_gt, **kw))
        ref = _reference_loss(logits_pred, tokens_gt)
        assert jnp.allclose(loss, ref, rtol=1e-5, atol=1e-5), (
            (B, S, N, str(dt)), float(loss), float(ref))

    print("KERNEL_OK")
</pallas_src>

<mosaic_0001>
module attributes {stable_mosaic.version = 11 : i64} {
  func.func @_partial_sums_kernel(%arg0: i32, %arg1: memref<4x128xf32, #tpu.memory_space<vmem>>, %arg2: memref<4x4xi8, #tpu.memory_space<vmem>>, %arg3: memref<1x3x128xf32, #tpu.memory_space<vmem>>) attributes {dimension_semantics = [#tpu.dimension_semantics<parallel>], iteration_bounds = array<i64: 1>, scalar_prefetch = 0 : i64, scratch_operands = 0 : i64, tpu.core_type = #tpu.core_type<tc>, window_params = [{transform_indices = @transform_0, window_bounds = array<i64: 4, 128>}, {transform_indices = @transform_1, window_bounds = array<i64: 4, 4>}, {transform_indices = @transform_2, window_bounds = array<i64: 1, 3, 128>}]} {
    %c0 = arith.constant 0 : index
    %c0_0 = arith.constant 0 : index
    %0 = vector.load %arg1[%c0, %c0_0] : memref<4x128xf32, #tpu.memory_space<vmem>>, vector<4x128xf32>
    %c0_1 = arith.constant 0 : index
    %c0_2 = arith.constant 0 : index
    %1 = vector.load %arg2[%c0_1, %c0_2] : memref<4x4xi8, #tpu.memory_space<vmem>>, vector<4x4xi8>
    %2 = arith.extsi %1 : vector<4x4xi8> to vector<4x4xi32>
    %cst = arith.constant 0.000000e+00 : f32
    %3 = vector.broadcast %cst : f32 to vector<4x128xf32>
    %4 = arith.maximumf %0, %3 : vector<4x128xf32>
    %5 = math.absf %0 : vector<4x128xf32>
    %cst_3 = arith.constant 0.000000e+00 : f32
    %6 = vector.broadcast %cst_3 : f32 to vector<4x128xf32>
    %7 = arith.subf %6, %5 : vector<4x128xf32>
    %8 = math.exp %7 : vector<4x128xf32>
    %9 = math.log1p %8 : vector<4x128xf32>
    %10 = arith.addf %4, %9 : vector<4x128xf32>
    %cst_4 = arith.constant 0.000000e+00 : f32
    %11 = vector.broadcast %cst_4 : f32 to vector<4x128xf32>
    %12 = arith.subf %11, %10 : vector<4x128xf32>
    %13 = tpu.iota {dimensions = array<i32: 1>} : vector<4x128xi32>
    %14 = vector.extract_strided_slice %2 {offsets = [0, 0], sizes = [4, 1], strides = [1, 1]} : vector<4x4xi32> to vector<4x1xi32>
    %15 = vector.broadcast %14 : vector<4x1xi32> to vector<4x128xi32>
    %16 = arith.cmpi eq, %13, %15 : vector<4x128xi32>
    %17 = vector.extract_strided_slice %2 {offsets = [0, 1], sizes = [4, 1], strides = [1, 1]} : vector<4x4xi32> to vector<4x1xi32>
    %18 = vector.broadcast %17 : vector<4x1xi32> to vector<4x128xi32>
    %19 = arith.cmpi eq, %13, %18 : vector<4x128xi32>
    %20 = arith.ori %16, %19 : vector<4x128xi1>
    %21 = vector.extract_strided_slice %2 {offsets = [0, 2], sizes = [4, 1], strides = [1, 1]} : vector<4x4xi32> to vector<4x1xi32>
    %22 = vector.broadcast %21 : vector<4x1xi32> to vector<4x128xi32>
    %23 = arith.cmpi eq, %13, %22 : vector<4x128xi32>
    %24 = arith.ori %20, %23 : vector<4x128xi1>
    %25 = vector.extract_strided_slice %2 {offsets = [0, 3], sizes = [4, 1], strides = [1, 1]} : vector<4x4xi32> to vector<4x1xi32>
    %26 = vector.broadcast %25 : vector<4x1xi32> to vector<4x128xi32>
    %27 = arith.cmpi eq, %13, %26 : vector<4x128xi32>
    %28 = arith.ori %24, %27 : vector<4x128xi1>
    %cst_5 = arith.constant dense<0.000000e+00> : vector<128xf32>
    %29 = vector.multi_reduction <add>, %12, %cst_5 [0] : vector<4x128xf32> to vector<128xf32>
    %30 = vector.shape_cast %29 : vector<128xf32> to vector<1x128xf32>
    %cst_6 = arith.constant 0.000000e+00 : f32
    %31 = vector.broadcast %cst_6 : f32 to vector<4x128xf32>
    %32 = arith.select %28, %0, %31 : vector<4x128xi1>, vector<4x128xf32>
    %cst_7 = arith.constant dense<0.000000e+00> : vector<128xf32>
    %33 = vector.multi_reduction <add>, %32, %cst_7 [0] : vector<4x128xf32> to vector<128xf32>
    %34 = vector.shape_cast %33 : vector<128xf32> to vector<1x128xf32>
    %cst_8 = arith.constant 0.000000e+00 : f32
    %35 = vector.broadcast %cst_8 : f32 to vector<4x128xf32>
    %36 = arith.select %28, %12, %35 : vector<4x128xi1>, vector<4x128xf32>
    %cst_9 = arith.constant dense<0.000000e+00> : vector<128xf32>
    %37 = vector.multi_reduction <add>, %36, %cst_9 [0] : vector<4x128xf32> to vector<128xf32>
    %38 = vector.shape_cast %37 : vector<128xf32> to vector<1x128xf32>
    %39 = tpu.concatenate %30, %34, %38 in 0 : vector<1x128xf32>, vector<1x128xf32>, vector<1x128xf32> -> vector<3x128xf32>
    %40 = vector.shape_cast %39 : vector<3x128xf32> to vector<1x3x128xf32>
    %c0_10 = arith.constant 0 : index
    %c0_11 = arith.constant 0 : index
    %c0_12 = arith.constant 0 : index
    %41 = vector.load %arg3[%c0_10, %c0_11, %c0_12] : memref<1x3x128xf32, #tpu.memory_space<vmem>>, vector<1x3x128xf32>
    tpu.vector_store %arg3[%c0_10, %c0_11, %c0_12], %40 {strides = array<i32>} : memref<1x3x128xf32, #tpu.memory_space<vmem>>, vector<1x3x128xf32>,
    return
  }
  func.func @transform_0(%arg0: i32) -> (i32, i32) {
    %c0_i32 = arith.constant 0 : i32
    %c0_i32_0 = arith.constant 0 : i32
    return %arg0, %c0_i32 : i32, i32
  }
  func.func @transform_1(%arg0: i32) -> (i32, i32) {
    %c0_i32 = arith.constant 0 : i32
    %c0_i32_0 = arith.constant 0 : i32
    return %arg0, %c0_i32 : i32, i32
  }
  func.func @transform_2(%arg0: i32) -> (i32, i32, i32) {
    %c0_i32 = arith.constant 0 : i32
    %c0_i32_0 = arith.constant 0 : i32
    %c0_i32_1 = arith.constant 0 : i32
    return %arg0, %c0_i32, %c0_i32_0 : i32, i32, i32
  }
}

</mosaic_0001>

<llo_original>
// kernel: tpu_custom_call.1
$region0: #{tpu_custom_call.1}
  #allocation0 [shape = 'u32[]', space=smem, size = 0x4, offset = 0x4, fixed_abs, tag = 'smem constant byte address 0x4 - core index']
  #allocation1 [shape = 'u32[144,128]{1,0:T(1,128)}', space=vmem, size = 0x12000, scoped, tag = 'internal scratch']
  %s0 = inlined_call_operand.hbm [shape: f32[4,128], index: 0, kind: input, shape index: {}]
  %s1 = inlined_call_operand.vmem [shape: s8[4,4], index: 1, kind: input, shape index: {}]
  %s2 = inlined_call_operand.vmem [shape: f32[1,3,128], index: 2, kind: output, shape index: {}]
  %s3 = sld [smem:[#allocation0]]
  $region22: #{tpu_custom_call.1} parent=0
    _
  %s5 = ssub.s32 1, %s3
  %s6 = scalar_select 0, %s5, %s3
  $region1: #{tpu_custom_call.1} parent=0
    #allocation2 [shape = 'u8[2048]{0}', space=vmem, size = 0x800, scoped, tag = 'input window, operand 0, single buffered']
    #allocation3 [shape = 's32[1]{0}', space=sflag, size = 0x4, scoped, tag = 'scoped memory for tpu_custom_call.1']
    %7 = vsyncpa [#allocation3], 0
    // Predicated region
    $region2: #{tpu_custom_call.1} parent=1 // pred_check
      _
    $region3: #{tpu_custom_call.1} parent=1 // pred_check_branch
      %9 = sbr.rel (0) target = $region5
    $region4: #{tpu_custom_call.1} parent=1 // pred_region
      %s11 = ssub.s32 64, 64
      %12 = vsyncadd [#allocation3], %s11
      %s14 = sshll.u32 [#allocation2], 4
      %s15 = int_to_ptr.vmem [resolvable:$true] %s14
      %17 = dma.hbm_to_vmem [thread:$0]  %s0, 64, %s15, [#allocation3]
    $region5: #{tpu_custom_call.1} parent=1 // pred_fallthru
      _
    // Predicated region
    $region6: #{tpu_custom_call.1} parent=1 // pred_check
      _
    $region7: #{tpu_custom_call.1} parent=1 // pred_check_branch
      %19 = sbr.rel (0) target = $region9
    $region8: #{tpu_custom_call.1} parent=1 // pred_region
      _
    $region9: #{tpu_custom_call.1} parent=1 // pred_fallthru
      _
    // Predicated region
    $region10: #{tpu_custom_call.1} parent=1 // pred_check
      _
    $region11: #{tpu_custom_call.1} parent=1 // pred_check_branch
      %21 = sbr.rel (0) target = $region13
    $region12: #{tpu_custom_call.1} parent=1 // pred_region
      %22 = dma.done [#allocation3], 64
    $region13: #{tpu_custom_call.1} parent=1 // pred_fallthru
      _
    %v23 = vld [vmem:[#allocation2] sm:$0xf]
    %v24 = vld [vmem:[%s1] sm:$0x1]
    %v25 = vunpack.c.0.s8 %v24
    %v26 = vmax.f32 %v23, 0.0
    %v27 = vand.u32 2147483647, %v23
    %v28 = vsub.f32 0.0, %v27
    %v29 = vmul.f32 %v28, 1.442695
    %v30 = vpow.pop %v29
    %v31 = vadd.f32 %v30, 1.0
    %v32 = vlog2.pop %v31
    %v33 = vmul.f32 %v32, 0.6931472
    %v34 = vmul.f32 -0.5, %v30
    %v35 = vadd.f32 %v34, 1.0
    %v36 = vmul.f32 %v35, %v30
    %v37 = vand.u32 2147483647, %v30
    %vm38 = vcmp.lt.f32.partialorder %v37, 0.0004427343
    %v39 = vsel %vm38, %v36, %v33
    %v40 = vadd.f32 %v26, %v39
    %v41 = vsub.f32 0.0, %v40
    %v42 = vlaneseq
    %v43 = vand.u32 %v42, 127
    %44 = vset.pattern.permute.xlu0 0
    %45 = vperm.xlu0 %44, %v25
    %v46 = vpop.permute.xlu0 %45
    %v48 = vunpack.c.l.s4 839922192
    %v49 = vunpack.c.0.s8 %v48
    %v50 = vlaneseq
    %v51 = vshrl.u32 %v50, 7
    %v52 = vsub.s32 %v49, %v51
    %v53 = vrot.slane %v46, %v52
    %vm54 = vcmp.eq.s32.totalorder %v43, %v53
    %55 = vset.pattern.permute.xlu0 1
    %56 = vperm.xlu0 %55, %v25
    %v57 = vpop.permute.xlu0 %56
    %v59 = vunpack.c.l.s4 839922192
    %v60 = vunpack.c.0.s8 %v59
    %v61 = vlaneseq
    %v62 = vshrl.u32 %v61, 7
    %v63 = vsub.s32 %v60, %v62
    %v64 = vrot.slane %v57, %v63
    %vm65 = vcmp.eq.s32.totalorder %v43, %v64
    %vm66 = vmor %vm54, %vm65
    %67 = vset.pattern.permute.xlu0 2
    %68 = vperm.xlu0 %67, %v25
    %v69 = vpop.permute.xlu0 %68
    %v71 = vunpack.c.l.s4 839922192
    %v72 = vunpack.c.0.s8 %v71
    %v73 = vlaneseq
    %v74 = vshrl.u32 %v73, 7
    %v75 = vsub.s32 %v72, %v74
    %v76 = vrot.slane %v69, %v75
    %vm77 = vcmp.eq.s32.totalorder %v43, %v76
    %vm78 = vmor %vm66, %vm77
    %79 = vset.pattern.permute.xlu0 3
    %80 = vperm.xlu0 %79, %v25
    %v81 = vpop.permute.xlu0 %80
    %v83 = vunpack.c.l.s4 839922192
    %v84 = vunpack.c.0.s8 %v83
    %v85 = vlaneseq
    %v86 = vshrl.u32 %v85, 7
    %v87 = vsub.s32 %v84, %v86
    %v88 = vrot.slane %v81, %v87
    %vm89 = vcmp.eq.s32.totalorder %v43, %v88
    %vm90 = vmor %vm78, %vm89
    %vm91 = vcmask 1043456
    %v92 = vsel %vm91, %v41, 0.0
    %v93 = vrot.slane %v92, 4
    %v94 = vadd.f32 %v92, %v93
    %v95 = vrot.slane %v94, 2
    %v96 = vadd.f32 %v94, %v95
    %v97 = vrot.slane %v96, 1
    %v98 = vadd.f32 %v96, %v97
    %v99 = vsel %vm90, %v23, 0.0
    %v100 = vsel %vm91, %v99, 0.0
    %v101 = vrot.slane %v100, 4
    %v102 = vadd.f32 %v100, %v101
    %v103 = vrot.slane %v102, 2
    %v104 = vadd.f32 %v102, %v103
    %v105 = vrot.slane %v104, 1
    %v106 = vadd.f32 %v104, %v105
    %v107 = vsel %vm90, %v41, 0.0
    %v108 = vsel %vm91, %v107, 0.0
    %v109 = vrot.slane %v108, 4
    %v110 = vadd.f32 %v108, %v109
    %v111 = vrot.slane %v110, 2
    %v112 = vadd.f32 %v110, %v111
    %v113 = vrot.slane %v112, 1
    %v114 = vadd.f32 %v112, %v113
    %vm115 = vcmask 1040384
    %v116 = vsel %vm115, %v98, %v106
    %vm117 = vcmask 1041408
    %v118 = vsel %vm117, %v116, %v114
    %119 = vst [vmem:[%s2] sm:$0x7] %v118
    // Predicated region
    $region14: #{tpu_custom_call.1} parent=1 // pred_check
      _
    $region15: #{tpu_custom_call.1} parent=1 // pred_check_branch
      %121 = sbr.rel (0) target = $region17
    $region16: #{tpu_custom_call.1} parent=1 // pred_region
      _
    $region17: #{tpu_custom_call.1} parent=1 // pred_fallthru
      _
    // Predicated region
    $region18: #{tpu_custom_call.1} parent=1 // pred_check
      _
    $region19: #{tpu_custom_call.1} parent=1 // pred_check_branch
      %123 = sbr.rel (0) target = $region21
    $region20: #{tpu_custom_call.1} parent=1 // pred_region
      _
    $region21: #{tpu_custom_call.1} parent=1 // pred_fallthru
      _
    %124 = vsyncpa [#allocation3], 1

</llo_original>
